<compile_context>
chip_gen: v7x
topology: tpu7x:2x2x1
jax: 0.10.0
libtpu: 0.0.40
codegen_flags: <defaults>
</compile_context>

<pallas_src>
import functools

import jax
import jax.numpy as jnp
from jax.experimental import pallas as pl
from jax.experimental.pallas import tpu as pltpu


def _round_up(x: int, m: int) -> int:
    return (x + m - 1) // m * m


def residual_linear_kernel(xb_ref, w_ref, b_ref, xr_ref, o_ref, *, approx_gelu: bool):
    """One (tm, tn) output tile of  y = gelu(x @ W + b) + x.

    xb_ref: (tm, Hp) bf16 matmul stream of x (full padded hidden dim)
    w_ref : (Hp, tn) bf16 weight column panel, (in, out) layout
    b_ref : (1, tn)  f32 bias slice
    xr_ref: (tm, tn) f32 residual slice of the ORIGINAL x (exact add)
    o_ref : (tm, tn) output tile
    """
    y = jnp.dot(xb_ref[...], w_ref[...], preferred_element_type=jnp.float32)
    y = jax.nn.gelu(y + b_ref[...], approximate=approx_gelu)   # f32 epilogue
    o_ref[...] = (y + xr_ref[...]).astype(o_ref.dtype)


def _vmem_capacity_bytes() -> int:
    try:
        info = pltpu.get_tpu_info()
        cap = int(getattr(info, "vmem_capacity_bytes", 0))
        if cap > 0:
            return cap
    except Exception:
        pass
    return 64 << 20        # conservative: v7x per-TensorCore VMEM


def _footprint_bytes(tm, tn, Hp, out_bytes, w_bufs):
    xb = 2 * tm * Hp * 2           # bf16 x matmul stream (double buffered)
    xr = 2 * tm * tn * 4           # f32 residual tile   (double buffered)
    w = w_bufs * Hp * tn * 2       # bf16 weight panel
    bias = w_bufs * 8 * tn * 4     # bias slice (sublane padded)
    out = 2 * tm * tn * out_bytes  # output tile         (double buffered)
    return xb + xr + w + bias + out


def _pick_tiles(M, Hp, out_bytes, budget):
    """Largest tn (ideally tn == Hp -> no x re-streaming) that fits the budget."""
    tm = min(256, _round_up(M, 16))                      # 16-row bf16 packing
    tn_candidates = [d for d in range(Hp, 0, -128) if Hp % d == 0]
    while True:
        for tn in tn_candidates:                         # descending -> prefer big tn
            if _footprint_bytes(tm, tn, Hp, out_bytes, w_bufs=1) <= budget:
                return tm, tn
        if tm <= 16:
            return tm, 128                               # smallest sane tiles
        tm = max(16, (tm // 2) // 16 * 16)


def residual_forward(x, w, b, *, out_dtype=None, exact_gelu=True):
    """Residual block gelu(x @ w + b) + x.

    x: (M, H) f32, w: (H, H) in (in, out) layout (PyTorch W^T), b: (H,).
    Returns (M, H) in `out_dtype` (default x.dtype; pass bf16 to halve the
    output write stream when downstream allows).
    """
    M, H = x.shape
    assert w.shape == (H, H) and b.shape == (H,)
    out_dtype = out_dtype if out_dtype is not None else x.dtype
    out_bytes = jnp.dtype(out_dtype).itemsize

    # Hidden dim padded to a multiple of 128 -> lane-dense (unmasked) stores and
    # dense MXU columns.  The M axis is NOT padded: grid uses cdiv and Pallas
    # masks the ragged last row tile (garbage rows are computed but discarded).
    Hp = _round_up(max(H, 128), 128)
    pad_h = Hp - H

    vmem_cap = _vmem_capacity_bytes()
    budget = (vmem_cap * 3) // 4                         # headroom for temps/scratch
    tm, tn = _pick_tiles(M, Hp, out_bytes, budget)
    num_n = Hp // tn                                     # weight column panels (outer)
    num_m = pl.cdiv(M, tm)                               # token tiles (inner, streamed)

    # Explicit scoped-VMEM limit: sized from the tile footprint (conservatively
    # assuming double-buffered weights in case Buffered(1) is unavailable).
    vmem_limit = int(min(
        vmem_cap,
        max(32 << 20, _footprint_bytes(tm, tn, Hp, out_bytes, w_bufs=2) + (16 << 20))))

    # Wrapper-side padding / casts (one pass; W cast happens once, not per step).
    xr = jnp.pad(x, ((0, 0), (0, pad_h))) if pad_h else x        # f32 residual source
    xb = xr.astype(jnp.bfloat16)                                 # bf16 matmul stream
    wp = (jnp.pad(w, ((0, pad_h), (0, pad_h))) if pad_h else w).astype(jnp.bfloat16)
    bp = (jnp.pad(b, (0, pad_h)) if pad_h else b).reshape(1, Hp).astype(jnp.float32)

    def call(single_buffer_weights: bool, approx_gelu: bool):
        def wspec(shape, index_map):
            if single_buffer_weights:
                # W / bias blocks only change on the outer N axis; a single
                # buffer halves the dominant VMEM consumer (cost: one exposed
                # W DMA per N panel, negligible when num_m is large).
                return pl.BlockSpec(shape, index_map, pipeline_mode=pl.Buffered(1))
            return pl.BlockSpec(shape, index_map)

        kernel = functools.partial(residual_linear_kernel, approx_gelu=approx_gelu)
        return pl.pallas_call(
            kernel,
            out_shape=jax.ShapeDtypeStruct((M, Hp), out_dtype),
            grid_spec=pltpu.PrefetchScalarGridSpec(
                num_scalar_prefetch=0,
                # N outer / M inner: weight & bias blocks stay resident in VMEM
                # across the whole inner M sweep while x/out tiles stream.
                grid=(num_n, num_m),
                in_specs=[
                    pl.BlockSpec((tm, Hp), lambda j, i: (i, 0)),   # bf16 x row panel
                    wspec((Hp, tn), lambda j, i: (0, j)),          # bf16 weight panel
                    wspec((1, tn), lambda j, i: (0, j)),           # f32 bias slice
                    pl.BlockSpec((tm, tn), lambda j, i: (i, j)),   # f32 residual tile
                ],
                out_specs=pl.BlockSpec((tm, tn), lambda j, i: (i, j)),
            ),
            compiler_params=pltpu.CompilerParams(
                # No reduction axis: both output axes are independent, so both
                # are parallel (megacore sharding on v7x; harmless v5e/v6e).
                dimension_semantics=("parallel", "parallel"),
                vmem_limit_bytes=vmem_limit),
            # TODO(synk): set input_output_aliases={3: 0} (alias the f32 residual
            # input with the output) when the caller no longer needs x.
        )(xb, wp, bp, xr)

    # Try the most optimized configuration first; fall back if this JAX/Mosaic
    # build rejects single-buffered BlockSpecs or the exact-erf GELU lowering.
    configs = [(True, not exact_gelu), (False, not exact_gelu)]
    if exact_gelu:
        configs += [(True, True), (False, True)]
    out = None
    for idx, (single_buf, approx) in enumerate(configs):
        try:
            out = call(single_buf, approx)
            break
        except Exception:
            if idx == len(configs) - 1:
                raise
    return out[:, :H]


if __name__ == "__main__":
    # Small shapes consistent with the module: batch=2, seq=8, hidden=32.
    batch, seq, hidden = 2, 8, 32
    M = batch * seq

    key = jax.random.PRNGKey(0)
    kx, kw, kb = jax.random.split(key, 3)

    x = jax.random.normal(kx, (batch, seq, hidden), dtype=jnp.float32)
    # Deterministic synthetic "Linear" params, (in, out) layout.
    w = jax.random.normal(kw, (hidden, hidden), dtype=jnp.float32) / jnp.sqrt(hidden)
    b = jax.random.normal(kb, (hidden,), dtype=jnp.float32) * 0.01

    x2d = x.reshape(M, hidden)
    out = residual_forward(x2d, w, b)
    out = jax.block_until_ready(out)

    # Reference with matched matmul precision (bf16 operands, f32 accumulate),
    # exact (erf) GELU as in PyTorch nn.GELU.
    y_ref = jnp.dot(x2d.astype(jnp.bfloat16), w.astype(jnp.bfloat16),
                    preferred_element_type=jnp.float32)
    ref = jax.nn.gelu(y_ref + b[None, :], approximate=False) + x2d
    assert jnp.allclose(out, ref, atol=5e-3, rtol=5e-3), "mismatch vs bf16-matmul reference"

    # Loose sanity check against full-f32 math (bf16 operands cost ~1e-2 abs).
    ref_f32 = jax.nn.gelu(x2d @ w + b[None, :], approximate=False) + x2d
    assert jnp.allclose(out, ref_f32, atol=5e-2, rtol=5e-2), "mismatch vs f32 reference"

    out3d = out.reshape(batch, seq, hidden)
    assert out3d.shape == (batch, seq, hidden)

    print("KERNEL_OK")
</pallas_src>

<mosaic_0001>
module attributes {stable_mosaic.version = 11 : i64} {
  func.func @residual_linear_kernel(%arg0: i32, %arg1: i32, %arg2: memref<16x128xbf16, #tpu.memory_space<vmem>>, %arg3: memref<128x128xbf16, #tpu.memory_space<vmem>>, %arg4: memref<1x128xf32, #tpu.memory_space<vmem>>, %arg5: memref<16x128xf32, #tpu.memory_space<vmem>>, %arg6: memref<16x128xf32, #tpu.memory_space<vmem>>) attributes {dimension_semantics = [#tpu.dimension_semantics<parallel>, #tpu.dimension_semantics<parallel>], iteration_bounds = array<i64: 1, 1>, scalar_prefetch = 0 : i64, scratch_operands = 0 : i64, tpu.core_type = #tpu.core_type<tc>, window_params = [{transform_indices = @transform_0, window_bounds = array<i64: 16, 128>}, {pipeline_mode = #tpu.pipeline_mode<synchronous>, transform_indices = @transform_1, window_bounds = array<i64: 128, 128>}, {pipeline_mode = #tpu.pipeline_mode<synchronous>, transform_indices = @transform_2, window_bounds = array<i64: 1, 128>}, {transform_indices = @transform_3, window_bounds = array<i64: 16, 128>}, {transform_indices = @transform_4, window_bounds = array<i64: 16, 128>}]} {
    %c0 = arith.constant 0 : index
    %c0_0 = arith.constant 0 : index
    %0 = vector.load %arg2[%c0, %c0_0] : memref<16x128xbf16, #tpu.memory_space<vmem>>, vector<16x128xbf16>
    %c0_1 = arith.constant 0 : index
    %c0_2 = arith.constant 0 : index
    %1 = vector.load %arg3[%c0_1, %c0_2] : memref<128x128xbf16, #tpu.memory_space<vmem>>, vector<128x128xbf16>
    %cst = arith.constant dense<0.000000e+00> : vector<16x128xf32>
    %2 = tpu.matmul %0, %1, %cst {dimension_numbers = #tpu.dot_dimension_numbers<[1], [0], [0], [1], [0, 0, 1, 1], [], []>} : vector<16x128xbf16>, vector<128x128xbf16>, vector<16x128xf32> -> vector<16x128xf32>
    %c0_3 = arith.constant 0 : index
    %c0_4 = arith.constant 0 : index
    %3 = vector.load %arg4[%c0_3, %c0_4] : memref<1x128xf32, #tpu.memory_space<vmem>>, vector<1x128xf32>
    %4 = vector.broadcast %3 : vector<1x128xf32> to vector<16x128xf32>
    %5 = arith.addf %2, %4 : vector<16x128xf32>
    %6 = arith.mulf %5, %5 : vector<16x128xf32>
    %7 = arith.mulf %5, %6 : vector<16x128xf32>
    %cst_5 = arith.constant 4.471500e-02 : f32
    %8 = vector.broadcast %cst_5 : f32 to vector<16x128xf32>
    %9 = arith.mulf %8, %7 : vector<16x128xf32>
    %10 = arith.addf %5, %9 : vector<16x128xf32>
    %cst_6 = arith.constant 0.797884583 : f32
    %11 = vector.broadcast %cst_6 : f32 to vector<16x128xf32>
    %12 = arith.mulf %11, %10 : vector<16x128xf32>
    %13 = math.tanh %12 : vector<16x128xf32>
    %cst_7 = arith.constant 1.000000e+00 : f32
    %14 = vector.broadcast %cst_7 : f32 to vector<16x128xf32>
    %15 = arith.addf %14, %13 : vector<16x128xf32>
    %cst_8 = arith.constant 5.000000e-01 : f32
    %16 = vector.broadcast %cst_8 : f32 to vector<16x128xf32>
    %17 = arith.mulf %16, %15 : vector<16x128xf32>
    %18 = arith.mulf %5, %17 : vector<16x128xf32>
    %c0_9 = arith.constant 0 : index
    %c0_10 = arith.constant 0 : index
    %19 = vector.load %arg5[%c0_9, %c0_10] : memref<16x128xf32, #tpu.memory_space<vmem>>, vector<16x128xf32>
    %20 = arith.addf %18, %19 : vector<16x128xf32>
    %c0_11 = arith.constant 0 : index
    %c0_12 = arith.constant 0 : index
    %21 = vector.load %arg6[%c0_11, %c0_12] : memref<16x128xf32, #tpu.memory_space<vmem>>, vector<16x128xf32>
    tpu.vector_store %arg6[%c0_11, %c0_12], %20 {strides = array<i32>} : memref<16x128xf32, #tpu.memory_space<vmem>>, vector<16x128xf32>,
    return
  }
  func.func @transform_0(%arg0: i32, %arg1: i32) -> (i32, i32) {
    %c0_i32 = arith.constant 0 : i32
    %c0_i32_0 = arith.constant 0 : i32
    return %arg1, %c0_i32 : i32, i32
  }
  func.func @transform_1(%arg0: i32, %arg1: i32) -> (i32, i32) {
    %c0_i32 = arith.constant 0 : i32
    %c0_i32_0 = arith.constant 0 : i32
    return %c0_i32, %arg0 : i32, i32
  }
  func.func @transform_2(%arg0: i32, %arg1: i32) -> (i32, i32) {
    %c0_i32 = arith.constant 0 : i32
    %c0_i32_0 = arith.constant 0 : i32
    return %c0_i32, %arg0 : i32, i32
  }
  func.func @transform_3(%arg0: i32, %arg1: i32) -> (i32, i32) {
    %c0_i32 = arith.constant 0 : i32
    return %arg1, %arg0 : i32, i32
  }
  func.func @transform_4(%arg0: i32, %arg1: i32) -> (i32, i32) {
    %c0_i32 = arith.constant 0 : i32
    return %arg1, %arg0 : i32, i32
  }
}

module attributes {stable_mosaic.version = 11 : i64} {
  func.func @residual_linear_kernel(%arg0: i32, %arg1: i32, %arg2: memref<16x128xbf16, #tpu.memory_space<vmem>>, %arg3: memref<128x128xbf16, #tpu.memory_space<vmem>>, %arg4: memref<1x128xf32, #tpu.memory_space<vmem>>, %arg5: memref<16x128xf32, #tpu.memory_space<vmem>>, %arg6: memref<16x128xf32, #tpu.memory_space<vmem>>) attributes {dimension_semantics = [#tpu.dimension_semantics<parallel>, #tpu.dimension_semantics<parallel>], iteration_bounds = array<i64: 1, 1>, scalar_prefetch = 0 : i64, scratch_operands = 0 : i64, tpu.core_type = #tpu.core_type<tc>, window_params = [{transform_indices = @transform_0, window_bounds = array<i64: 16, 128>}, {transform_indices = @transform_1, window_bounds = array<i64: 128, 128>}, {transform_indices = @transform_2, window_bounds = array<i64: 1, 128>}, {transform_indices = @transform_3, window_bounds = array<i64: 16, 128>}, {transform_indices = @transform_4, window_bounds = array<i64: 16, 128>}]} {
    %c0 = arith.constant 0 : index
    %c0_0 = arith.constant 0 : index
    %0 = vector.load %arg2[%c0, %c0_0] : memref<16x128xbf16, #tpu.memory_space<vmem>>, vector<16x128xbf16>
    %c0_1 = arith.constant 0 : index
    %c0_2 = arith.constant 0 : index
    %1 = vector.load %arg3[%c0_1, %c0_2] : memref<128x128xbf16, #tpu.memory_space<vmem>>, vector<128x128xbf16>
    %cst = arith.constant dense<0.000000e+00> : vector<16x128xf32>
    %2 = tpu.matmul %0, %1, %cst {dimension_numbers = #tpu.dot_dimension_numbers<[1], [0], [0], [1], [0, 0, 1, 1], [], []>} : vector<16x128xbf16>, vector<128x128xbf16>, vector<16x128xf32> -> vector<16x128xf32>
    %c0_3 = arith.constant 0 : index
    %c0_4 = arith.constant 0 : index
    %3 = vector.load %arg4[%c0_3, %c0_4] : memref<1x128xf32, #tpu.memory_space<vmem>>, vector<1x128xf32>
    %4 = vector.broadcast %3 : vector<1x128xf32> to vector<16x128xf32>
    %5 = arith.addf %2, %4 : vector<16x128xf32>
    %6 = arith.mulf %5, %5 : vector<16x128xf32>
    %7 = arith.mulf %5, %6 : vector<16x128xf32>
    %cst_5 = arith.constant 4.471500e-02 : f32
    %8 = vector.broadcast %cst_5 : f32 to vector<16x128xf32>
    %9 = arith.mulf %8, %7 : vector<16x128xf32>
    %10 = arith.addf %5, %9 : vector<16x128xf32>
    %cst_6 = arith.constant 0.797884583 : f32
    %11 = vector.broadcast %cst_6 : f32 to vector<16x128xf32>
    %12 = arith.mulf %11, %10 : vector<16x128xf32>
    %13 = math.tanh %12 : vector<16x128xf32>
    %cst_7 = arith.constant 1.000000e+00 : f32
    %14 = vector.broadcast %cst_7 : f32 to vector<16x128xf32>
    %15 = arith.addf %14, %13 : vector<16x128xf32>
    %cst_8 = arith.constant 5.000000e-01 : f32
    %16 = vector.broadcast %cst_8 : f32 to vector<16x128xf32>
    %17 = arith.mulf %16, %15 : vector<16x128xf32>
    %18 = arith.mulf %5, %17 : vector<16x128xf32>
    %c0_9 = arith.constant 0 : index
    %c0_10 = arith.constant 0 : index
    %19 = vector.load %arg5[%c0_9, %c0_10] : memref<16x128xf32, #tpu.memory_space<vmem>>, vector<16x128xf32>
    %20 = arith.addf %18, %19 : vector<16x128xf32>
    %c0_11 = arith.constant 0 : index
    %c0_12 = arith.constant 0 : index
    %21 = vector.load %arg6[%c0_11, %c0_12] : memref<16x128xf32, #tpu.memory_space<vmem>>, vector<16x128xf32>
    tpu.vector_store %arg6[%c0_11, %c0_12], %20 {strides = array<i32>} : memref<16x128xf32, #tpu.memory_space<vmem>>, vector<16x128xf32>,
    return
  }
  func.func @transform_0(%arg0: i32, %arg1: i32) -> (i32, i32) {
    %c0_i32 = arith.constant 0 : i32
    %c0_i32_0 = arith.constant 0 : i32
    return %arg1, %c0_i32 : i32, i32
  }
  func.func @transform_1(%arg0: i32, %arg1: i32) -> (i32, i32) {
    %c0_i32 = arith.constant 0 : i32
    %c0_i32_0 = arith.constant 0 : i32
    return %c0_i32, %arg0 : i32, i32
  }
  func.func @transform_2(%arg0: i32, %arg1: i32) -> (i32, i32) {
    %c0_i32 = arith.constant 0 : i32
    %c0_i32_0 = arith.constant 0 : i32
    return %c0_i32, %arg0 : i32, i32
  }
  func.func @transform_3(%arg0: i32, %arg1: i32) -> (i32, i32) {
    %c0_i32 = arith.constant 0 : i32
    return %arg1, %arg0 : i32, i32
  }
  func.func @transform_4(%arg0: i32, %arg1: i32) -> (i32, i32) {
    %c0_i32 = arith.constant 0 : i32
    return %arg1, %arg0 : i32, i32
  }
}

</mosaic_0001>

<llo_original>
// kernel: tpu_custom_call.1
$region0: #{tpu_custom_call.1}
  #allocation0 [shape = 'u32[]', space=smem, size = 0x4, offset = 0x4, fixed_abs, tag = 'smem constant byte address 0x4 - core index']
  #allocation1 [shape = 'u32[144,128]{1,0:T(1,128)}', space=vmem, size = 0x12000, scoped, tag = 'internal scratch']
  %s0 = inlined_call_operand.hbm [shape: bf16[16,128], index: 0, kind: input, shape index: {}]
  %s1 = inlined_call_operand.hbm [shape: bf16[128,128], index: 1, kind: input, shape index: {}]
  %s2 = inlined_call_operand.vmem [shape: f32[1,128], index: 2, kind: input, shape index: {}]
  %s3 = inlined_call_operand.hbm [shape: f32[16,128], index: 3, kind: input, shape index: {}]
  %s4 = inlined_call_operand.hbm [shape: f32[16,128], index: 4, kind: output, shape index: {}]
  %s5 = sld [smem:[#allocation0]]
  $region38: #{tpu_custom_call.1} parent=0
    _
  %s7 = ssub.s32 1, %s5
  %s8 = scalar_select 0, %s7, %s5
  $region1: #{tpu_custom_call.1} parent=0
    #allocation2 [shape = 'u8[4096]{0}', space=vmem, size = 0x1000, scoped, tag = 'input window, operand 0, single buffered']
    #allocation3 [shape = 's32[1]{0}', space=sflag, size = 0x4, scoped, tag = 'scoped memory for tpu_custom_call.1']
    #allocation4 [shape = 's32[1]{0}', space=sflag, size = 0x4, scoped, tag = 'scoped memory for tpu_custom_call.1']
    #allocation5 [shape = 'u8[32768]{0}', space=vmem, size = 0x8000, scoped, tag = 'input window, operand 1, single buffered']
    #allocation6 [shape = 's32[1]{0}', space=sflag, size = 0x4, scoped, tag = 'scoped memory for tpu_custom_call.1']
    #allocation7 [shape = 'u8[8192]{0}', space=vmem, size = 0x2000, scoped, tag = 'input window, operand 3, single buffered']
    #allocation8 [shape = 'u8[8192]{0}', space=vmem, size = 0x2000, scoped, tag = 'output window, operand 0, single buffered']
    %9 = vsyncpa [#allocation3], 0
    %10 = vsyncpa [#allocation6], 0
    %11 = vsyncpa [#allocation4], 0
    // Predicated region
    $region2: #{tpu_custom_call.1} parent=1 // pred_check
      _
    $region3: #{tpu_custom_call.1} parent=1 // pred_check_branch
      %13 = sbr.rel (0) target = $region5
    $region4: #{tpu_custom_call.1} parent=1 // pred_region
      %s15 = ssub.s32 128, 128
      %16 = vsyncadd [#allocation3], %s15
      %s17 = sshll.u32 [#allocation2], 4
      %s18 = int_to_ptr.vmem [resolvable:$true] %s17
      %23 = dma.hbm_to_vmem [thread:$0]  %s0, 128, %s18, [#allocation3], 64, 64, 4
    $region5: #{tpu_custom_call.1} parent=1 // pred_fallthru
      _
    // Predicated region
    $region6: #{tpu_custom_call.1} parent=1 // pred_check
      _
    $region7: #{tpu_custom_call.1} parent=1 // pred_check_branch
      %25 = sbr.rel (0) target = $region9
    $region8: #{tpu_custom_call.1} parent=1 // pred_region
      %s27 = ssub.s32 1024, 1024
      %28 = vsyncadd [#allocation6], %s27
      %s29 = sshll.u32 [#allocation5], 4
      %s30 = int_to_ptr.vmem [resolvable:$true] %s29
      %35 = dma.hbm_to_vmem [thread:$0]  %s1, 1024, %s30, [#allocation6], 64, 64, 4
    $region9: #{tpu_custom_call.1} parent=1 // pred_fallthru
      _
    // Predicated region
    $region10: #{tpu_custom_call.1} parent=1 // pred_check
      _
    $region11: #{tpu_custom_call.1} parent=1 // pred_check_branch
      %37 = sbr.rel (0) target = $region13
    $region12: #{tpu_custom_call.1} parent=1 // pred_region
      _
    $region13: #{tpu_custom_call.1} parent=1 // pred_fallthru
      _
    // Predicated region
    $region14: #{tpu_custom_call.1} parent=1 // pred_check
      _
    $region15: #{tpu_custom_call.1} parent=1 // pred_check_branch
      %39 = sbr.rel (0) target = $region17
    $region16: #{tpu_custom_call.1} parent=1 // pred_region
      %s41 = ssub.s32 256, 256
      %42 = vsyncadd [#allocation6], %s41
      %s43 = sshll.u32 [#allocation7], 4
      %s44 = int_to_ptr.vmem [resolvable:$true] %s43
      %49 = dma.hbm_to_vmem [thread:$0]  %s3, 256, %s44, [#allocation6], 128, 128, 8
    $region17: #{tpu_custom_call.1} parent=1 // pred_fallthru
      _
    // Predicated region
    $region18: #{tpu_custom_call.1} parent=1 // pred_check
      _
    $region19: #{tpu_custom_call.1} parent=1 // pred_check_branch
      %51 = sbr.rel (0) target = $region21
    $region20: #{tpu_custom_call.1} parent=1 // pred_region
      %52 = dma.done [#allocation3], 128
    $region21: #{tpu_custom_call.1} parent=1 // pred_fallthru
      _
    // Predicated region
    $region22: #{tpu_custom_call.1} parent=1 // pred_check
      _
    $region23: #{tpu_custom_call.1} parent=1 // pred_check_branch
      %54 = sbr.rel (0) target = $region25
    $region24: #{tpu_custom_call.1} parent=1 // pred_region
      %55 = dma.done [#allocation6], 1024
    $region25: #{tpu_custom_call.1} parent=1 // pred_fallthru
      _
    // Predicated region
    $region26: #{tpu_custom_call.1} parent=1 // pred_check
      _
    $region27: #{tpu_custom_call.1} parent=1 // pred_check_branch
      %57 = sbr.rel (0) target = $region29
    $region28: #{tpu_custom_call.1} parent=1 // pred_region
      %58 = dma.done [#allocation6], 256
    $region29: #{tpu_custom_call.1} parent=1 // pred_fallthru
      _
    %v60 = vld [vmem:[#allocation2] sm:$0xf]
    %v61 = vld [vmem:[#allocation2 + $0x4] sm:$0xf]
    %v62 = vld [vmem:[#allocation5] sm:$0xf]
    %v63 = vld [vmem:[#allocation5 + $0x4] sm:$0xf]
    %v64 = vld [vmem:[#allocation5 + $0x8] sm:$0xf]
    %v65 = vld [vmem:[#allocation5 + $0xc] sm:$0xf]
    %v66 = vld [vmem:[#allocation5 + $0x10] sm:$0xf]
    %v67 = vld [vmem:[#allocation5 + $0x14] sm:$0xf]
    %v68 = vld [vmem:[#allocation5 + $0x18] sm:$0xf]
    %v69 = vld [vmem:[#allocation5 + $0x1c] sm:$0xf]
    %v70 = vld [vmem:[#allocation5 + $0x20] sm:$0xf]
    %v71 = vld [vmem:[#allocation5 + $0x24] sm:$0xf]
    %v72 = vld [vmem:[#allocation5 + $0x28] sm:$0xf]
    %v73 = vld [vmem:[#allocation5 + $0x2c] sm:$0xf]
    %v74 = vld [vmem:[#allocation5 + $0x30] sm:$0xf]
    %v75 = vld [vmem:[#allocation5 + $0x34] sm:$0xf]
    %v76 = vld [vmem:[#allocation5 + $0x38] sm:$0xf]
    %v77 = vld [vmem:[#allocation5 + $0x3c] sm:$0xf]
    %v78 = vld [vmem:[%s2] sm:$0x1]
    %v80 = vlaneseq
    %v81 = vshrl.u32 %v80, 7
    %v82 = vsub.s32 0, %v81
    %v83 = vrot.slane %v78, %v82
    %v87 = vunpack.c.l.b16 %v60
    %v88 = vunpack.c.l.b16 %v61
    %v89 = vpack.c.b16 %v88, %v87
    %v107 = vunpack.c.l.b16 %v62
    %v108 = vunpack.c.l.b16 %v63
    %v109 = vunpack.c.l.b16 %v64
    %v110 = vunpack.c.l.b16 %v65
    %v111 = vunpack.c.l.b16 %v66
    %v112 = vunpack.c.l.b16 %v67
    %v113 = vunpack.c.l.b16 %v68
    %v114 = vunpack.c.l.b16 %v69
    %v115 = vunpack.c.l.b16 %v70
    %v116 = vunpack.c.l.b16 %v71
    %v117 = vunpack.c.l.b16 %v72
    %v118 = vunpack.c.l.b16 %v73
    %v119 = vunpack.c.l.b16 %v74
    %v120 = vunpack.c.l.b16 %v75
    %v121 = vunpack.c.l.b16 %v76
    %v122 = vunpack.c.l.b16 %v77
    %v123 = vpack.c.b16 %v108, %v107
    %v124 = vpack.c.b16 %v110, %v109
    %v125 = vpack.c.b16 %v112, %v111
    %v126 = vpack.c.b16 %v114, %v113
    %v127 = vpack.c.b16 %v116, %v115
    %v128 = vpack.c.b16 %v118, %v117
    %v129 = vpack.c.b16 %v120, %v119
    %v130 = vpack.c.b16 %v122, %v121
    %139 = vmatprep.subr.bf16.mxu0 0
    %140 = vmatpush1.bf16.msra.mxu0 %v123
    %141 = vmatprep.subr.bf16.mxu0 0
    %142 = vmatpush1.bf16.msra.mxu0 %v124
    %143 = vmatprep.subr.bf16.mxu0 0
    %144 = vmatpush1.bf16.msra.mxu0 %v125
    %145 = vmatprep.subr.bf16.mxu0 0
    %146 = vmatpush1.bf16.msra.mxu0 %v126
    %147 = vmatprep.subr.bf16.mxu0 0
    %148 = vmatpush1.bf16.msra.mxu0 %v127
    %149 = vmatprep.subr.bf16.mxu0 0
    %150 = vmatpush1.bf16.msra.mxu0 %v128
    %151 = vmatprep.subr.bf16.mxu0 0
    %152 = vmatpush1.bf16.msra.mxu0 %v129
    %153 = vmatprep.subr.bf16.mxu0 0
    %154 = vmatpush1.bf16.msra.mxu0 %v130
    %155 = vmatprep.subr.bf16.mxu0 0
    %156 = vmatpush1.bf16.msra.mxu0 0
    %157 = vmatprep.subr.bf16.mxu0 0
    %158 = vmatpush1.bf16.msra.mxu0 0
    %159 = vmatprep.subr.bf16.mxu0 0
    %160 = vmatpush1.bf16.msra.mxu0 0
    %161 = vmatprep.subr.bf16.mxu0 0
    %162 = vmatpush1.bf16.msra.mxu0 0
    %163 = vmatprep.subr.bf16.mxu0 0
    %164 = vmatpush1.bf16.msra.mxu0 0
    %165 = vmatprep.subr.bf16.mxu0 0
    %166 = vmatpush1.bf16.msra.mxu0 0
    %167 = vmatprep.subr.bf16.mxu0 0
    %168 = vmatpush1.bf16.msra.mxu0 0
    %169 = vmatprep.subr.bf16.mxu0 0
    %170 = vmatpush1.bf16.msra.mxu0 0
    %171 = vmatprep.mubr.bf16.mxu0 0
    %172 = vmatmul.mubr.bf16.gmra.mrb[0].mxu0 %v89
    %v173 = vpop.f32.mrb[0].mxu0
    %v174 = vadd.f32 %v83, %v173
    %v175 = vpop.f32.mrb[0].mxu0
    %v176 = vpop.f32.mrb[0].mxu0
    %v177 = vadd.f32 %v83, %v176
    %v178 = vpop.f32.mrb[0].mxu0
    %179 = vdwg.mxu0
    %v180 = vmul.f32 %v174, %v174
    %v181 = vmul.f32 %v177, %v177
    %v182 = vmul.f32 %v174, %v180
    %v183 = vmul.f32 %v177, %v181
    %v184 = vmul.f32 %v182, 0.044715
    %v185 = vmul.f32 %v183, 0.044715
    %v186 = vadd.f32 %v174, %v184
    %v187 = vadd.f32 %v177, %v185
    %v188 = vmul.f32 %v186, 0.7978846
    %v189 = vmul.f32 %v187, 0.7978846
    %v190 = vtanh.pop %v188
    %v191 = vtanh.pop %v189
    %v192 = vadd.f32 %v190, 1.0
    %v193 = vadd.f32 %v191, 1.0
    %v194 = vmul.f32 %v192, 0.5
    %v195 = vmul.f32 %v193, 0.5
    %v196 = vmul.f32 %v174, %v194
    %v197 = vmul.f32 %v177, %v195
    %v198 = vld [vmem:[#allocation7] sm:$0xff]
    %v199 = vld [vmem:[#allocation7 + $0x8] sm:$0xff]
    %v200 = vadd.f32 %v196, %v198
    %v201 = vadd.f32 %v197, %v199
    %202 = vst [vmem:[#allocation8] sm:$0xff] %v200
    %203 = vst [vmem:[#allocation8 + $0x8] sm:$0xff] %v201
    // Predicated region
    $region30: #{tpu_custom_call.1} parent=1 // pred_check
      _
    $region31: #{tpu_custom_call.1} parent=1 // pred_check_branch
      %205 = sbr.rel (0) target = $region33
    $region32: #{tpu_custom_call.1} parent=1 // pred_region
      %s207 = ssub.s32 256, 256
      %208 = vsyncadd [#allocation4], %s207
      %s209 = sshll.u32 [#allocation8], 4
      %s210 = int_to_ptr.vmem [resolvable:$true] %s209
      %215 = dma.vmem_to_hbm [thread:$0]  %s210, 256, %s4, [#allocation4], 128, 128, 8
    $region33: #{tpu_custom_call.1} parent=1 // pred_fallthru
      _
    // Predicated region
    $region34: #{tpu_custom_call.1} parent=1 // pred_check
      _
    $region35: #{tpu_custom_call.1} parent=1 // pred_check_branch
      %217 = sbr.rel (0) target = $region37
    $region36: #{tpu_custom_call.1} parent=1 // pred_region
      %218 = dma.done [#allocation4], 256
    $region37: #{tpu_custom_call.1} parent=1 // pred_fallthru
      _
    %219 = vsyncpa [#allocation3], 1
    %220 = vsyncpa [#allocation6], 1
    %221 = vsyncpa [#allocation4], 1

// kernel: tpu_custom_call.1
$region0: #{tpu_custom_call.1}
  #allocation0 [shape = 'u32[]', space=smem, size = 0x4, offset = 0x4, fixed_abs, tag = 'smem constant byte address 0x4 - core index']
  #allocation1 [shape = 'u32[144,128]{1,0:T(1,128)}', space=vmem, size = 0x12000, scoped, tag = 'internal scratch']
  %s0 = inlined_call_operand.hbm [shape: bf16[16,128], index: 0, kind: input, shape index: {}]
  %s1 = inlined_call_operand.hbm [shape: bf16[128,128], index: 1, kind: input, shape index: {}]
  %s2 = inlined_call_operand.vmem [shape: f32[1,128], index: 2, kind: input, shape index: {}]
  %s3 = inlined_call_operand.hbm [shape: f32[16,128], index: 3, kind: input, shape index: {}]
  %s4 = inlined_call_operand.hbm [shape: f32[16,128], index: 4, kind: output, shape index: {}]
  %s5 = sld [smem:[#allocation0]]
  $region38: #{tpu_custom_call.1} parent=0
    _
  %s7 = ssub.s32 1, %s5
  %s8 = scalar_select 0, %s7, %s5
  $region1: #{tpu_custom_call.1} parent=0
    #allocation2 [shape = 'u8[4096]{0}', space=vmem, size = 0x1000, scoped, tag = 'input window, operand 0, single buffered']
    #allocation3 [shape = 's32[1]{0}', space=sflag, size = 0x4, scoped, tag = 'scoped memory for tpu_custom_call.1']
    #allocation4 [shape = 's32[1]{0}', space=sflag, size = 0x4, scoped, tag = 'scoped memory for tpu_custom_call.1']
    #allocation5 [shape = 'u8[32768]{0}', space=vmem, size = 0x8000, scoped, tag = 'input window, operand 1, single buffered']
    #allocation6 [shape = 's32[1]{0}', space=sflag, size = 0x4, scoped, tag = 'scoped memory for tpu_custom_call.1']
    #allocation7 [shape = 'u8[8192]{0}', space=vmem, size = 0x2000, scoped, tag = 'input window, operand 3, single buffered']
    #allocation8 [shape = 'u8[8192]{0}', space=vmem, size = 0x2000, scoped, tag = 'output window, operand 0, single buffered']
    %9 = vsyncpa [#allocation3], 0
    %10 = vsyncpa [#allocation6], 0
    %11 = vsyncpa [#allocation4], 0
    // Predicated region
    $region2: #{tpu_custom_call.1} parent=1 // pred_check
      _
    $region3: #{tpu_custom_call.1} parent=1 // pred_check_branch
      %13 = sbr.rel (0) target = $region5
    $region4: #{tpu_custom_call.1} parent=1 // pred_region
      %s15 = ssub.s32 128, 128
      %16 = vsyncadd [#allocation3], %s15
      %s17 = sshll.u32 [#allocation2], 4
      %s18 = int_to_ptr.vmem [resolvable:$true] %s17
      %23 = dma.hbm_to_vmem [thread:$0]  %s0, 128, %s18, [#allocation3], 64, 64, 4
    $region5: #{tpu_custom_call.1} parent=1 // pred_fallthru
      _
    // Predicated region
    $region6: #{tpu_custom_call.1} parent=1 // pred_check
      _
    $region7: #{tpu_custom_call.1} parent=1 // pred_check_branch
      %25 = sbr.rel (0) target = $region9
    $region8: #{tpu_custom_call.1} parent=1 // pred_region
      %s27 = ssub.s32 1024, 1024
      %28 = vsyncadd [#allocation6], %s27
      %s29 = sshll.u32 [#allocation5], 4
      %s30 = int_to_ptr.vmem [resolvable:$true] %s29
      %35 = dma.hbm_to_vmem [thread:$0]  %s1, 1024, %s30, [#allocation6], 64, 64, 4
    $region9: #{tpu_custom_call.1} parent=1 // pred_fallthru
      _
    // Predicated region
    $region10: #{tpu_custom_call.1} parent=1 // pred_check
      _
    $region11: #{tpu_custom_call.1} parent=1 // pred_check_branch
      %37 = sbr.rel (0) target = $region13
    $region12: #{tpu_custom_call.1} parent=1 // pred_region
      _
    $region13: #{tpu_custom_call.1} parent=1 // pred_fallthru
      _
    // Predicated region
    $region14: #{tpu_custom_call.1} parent=1 // pred_check
      _
    $region15: #{tpu_custom_call.1} parent=1 // pred_check_branch
      %39 = sbr.rel (0) target = $region17
    $region16: #{tpu_custom_call.1} parent=1 // pred_region
      %s41 = ssub.s32 256, 256
      %42 = vsyncadd [#allocation6], %s41
      %s43 = sshll.u32 [#allocation7], 4
      %s44 = int_to_ptr.vmem [resolvable:$true] %s43
      %49 = dma.hbm_to_vmem [thread:$0]  %s3, 256, %s44, [#allocation6], 128, 128, 8
    $region17: #{tpu_custom_call.1} parent=1 // pred_fallthru
      _
    // Predicated region
    $region18: #{tpu_custom_call.1} parent=1 // pred_check
      _
    $region19: #{tpu_custom_call.1} parent=1 // pred_check_branch
      %51 = sbr.rel (0) target = $region21
    $region20: #{tpu_custom_call.1} parent=1 // pred_region
      %52 = dma.done [#allocation3], 128
    $region21: #{tpu_custom_call.1} parent=1 // pred_fallthru
      _
    // Predicated region
    $region22: #{tpu_custom_call.1} parent=1 // pred_check
      _
    $region23: #{tpu_custom_call.1} parent=1 // pred_check_branch
      %54 = sbr.rel (0) target = $region25
    $region24: #{tpu_custom_call.1} parent=1 // pred_region
      %55 = dma.done [#allocation6], 1024
    $region25: #{tpu_custom_call.1} parent=1 // pred_fallthru
      _
    // Predicated region
    $region26: #{tpu_custom_call.1} parent=1 // pred_check
      _
    $region27: #{tpu_custom_call.1} parent=1 // pred_check_branch
      %57 = sbr.rel (0) target = $region29
    $region28: #{tpu_custom_call.1} parent=1 // pred_region
      %58 = dma.done [#allocation6], 256
    $region29: #{tpu_custom_call.1} parent=1 // pred_fallthru
      _
    %v60 = vld [vmem:[#allocation2] sm:$0xf]
    %v61 = vld [vmem:[#allocation2 + $0x4] sm:$0xf]
    %v62 = vld [vmem:[#allocation5] sm:$0xf]
    %v63 = vld [vmem:[#allocation5 + $0x4] sm:$0xf]
    %v64 = vld [vmem:[#allocation5 + $0x8] sm:$0xf]
    %v65 = vld [vmem:[#allocation5 + $0xc] sm:$0xf]
    %v66 = vld [vmem:[#allocation5 + $0x10] sm:$0xf]
    %v67 = vld [vmem:[#allocation5 + $0x14] sm:$0xf]
    %v68 = vld [vmem:[#allocation5 + $0x18] sm:$0xf]
    %v69 = vld [vmem:[#allocation5 + $0x1c] sm:$0xf]
    %v70 = vld [vmem:[#allocation5 + $0x20] sm:$0xf]
    %v71 = vld [vmem:[#allocation5 + $0x24] sm:$0xf]
    %v72 = vld [vmem:[#allocation5 + $0x28] sm:$0xf]
    %v73 = vld [vmem:[#allocation5 + $0x2c] sm:$0xf]
    %v74 = vld [vmem:[#allocation5 + $0x30] sm:$0xf]
    %v75 = vld [vmem:[#allocation5 + $0x34] sm:$0xf]
    %v76 = vld [vmem:[#allocation5 + $0x38] sm:$0xf]
    %v77 = vld [vmem:[#allocation5 + $0x3c] sm:$0xf]
    %v78 = vld [vmem:[%s2] sm:$0x1]
    %v80 = vlaneseq
    %v81 = vshrl.u32 %v80, 7
    %v82 = vsub.s32 0, %v81
    %v83 = vrot.slane %v78, %v82
    %v87 = vunpack.c.l.b16 %v60
    %v88 = vunpack.c.l.b16 %v61
    %v89 = vpack.c.b16 %v88, %v87
    %v107 = vunpack.c.l.b16 %v62
    %v108 = vunpack.c.l.b16 %v63
    %v109 = vunpack.c.l.b16 %v64
    %v110 = vunpack.c.l.b16 %v65
    %v111 = vunpack.c.l.b16 %v66
    %v112 = vunpack.c.l.b16 %v67
    %v113 = vunpack.c.l.b16 %v68
    %v114 = vunpack.c.l.b16 %v69
    %v115 = vunpack.c.l.b16 %v70
    %v116 = vunpack.c.l.b16 %v71
    %v117 = vunpack.c.l.b16 %v72
    %v118 = vunpack.c.l.b16 %v73
    %v119 = vunpack.c.l.b16 %v74
    %v120 = vunpack.c.l.b16 %v75
    %v121 = vunpack.c.l.b16 %v76
    %v122 = vunpack.c.l.b16 %v77
    %v123 = vpack.c.b16 %v108, %v107
    %v124 = vpack.c.b16 %v110, %v109
    %v125 = vpack.c.b16 %v112, %v111
    %v126 = vpack.c.b16 %v114, %v113
    %v127 = vpack.c.b16 %v116, %v115
    %v128 = vpack.c.b16 %v118, %v117
    %v129 = vpack.c.b16 %v120, %v119
    %v130 = vpack.c.b16 %v122, %v121
    %139 = vmatprep.subr.bf16.mxu0 0
    %140 = vmatpush1.bf16.msra.mxu0 %v123
    %141 = vmatprep.subr.bf16.mxu0 0
    %142 = vmatpush1.bf16.msra.mxu0 %v124
    %143 = vmatprep.subr.bf16.mxu0 0
    %144 = vmatpush1.bf16.msra.mxu0 %v125
    %145 = vmatprep.subr.bf16.mxu0 0
    %146 = vmatpush1.bf16.msra.mxu0 %v126
    %147 = vmatprep.subr.bf16.mxu0 0
    %148 = vmatpush1.bf16.msra.mxu0 %v127
    %149 = vmatprep.subr.bf16.mxu0 0
    %150 = vmatpush1.bf16.msra.mxu0 %v128
    %151 = vmatprep.subr.bf16.mxu0 0
    %152 = vmatpush1.bf16.msra.mxu0 %v129
    %153 = vmatprep.subr.bf16.mxu0 0
    %154 = vmatpush1.bf16.msra.mxu0 %v130
    %155 = vmatprep.subr.bf16.mxu0 0
    %156 = vmatpush1.bf16.msra.mxu0 0
    %157 = vmatprep.subr.bf16.mxu0 0
    %158 = vmatpush1.bf16.msra.mxu0 0
    %159 = vmatprep.subr.bf16.mxu0 0
    %160 = vmatpush1.bf16.msra.mxu0 0
    %161 = vmatprep.subr.bf16.mxu0 0
    %162 = vmatpush1.bf16.msra.mxu0 0
    %163 = vmatprep.subr.bf16.mxu0 0
    %164 = vmatpush1.bf16.msra.mxu0 0
    %165 = vmatprep.subr.bf16.mxu0 0
    %166 = vmatpush1.bf16.msra.mxu0 0
    %167 = vmatprep.subr.bf16.mxu0 0
    %168 = vmatpush1.bf16.msra.mxu0 0
    %169 = vmatprep.subr.bf16.mxu0 0
    %170 = vmatpush1.bf16.msra.mxu0 0
    %171 = vmatprep.mubr.bf16.mxu0 0
    %172 = vmatmul.mubr.bf16.gmra.mrb[0].mxu0 %v89
    %v173 = vpop.f32.mrb[0].mxu0
    %v174 = vadd.f32 %v83, %v173
    %v175 = vpop.f32.mrb[0].mxu0
    %v176 = vpop.f32.mrb[0].mxu0
    %v177 = vadd.f32 %v83, %v176
    %v178 = vpop.f32.mrb[0].mxu0
    %179 = vdwg.mxu0
    %v180 = vmul.f32 %v174, %v174
    %v181 = vmul.f32 %v177, %v177
    %v182 = vmul.f32 %v174, %v180
    %v183 = vmul.f32 %v177, %v181
    %v184 = vmul.f32 %v182, 0.044715
    %v185 = vmul.f32 %v183, 0.044715
    %v186 = vadd.f32 %v174, %v184
    %v187 = vadd.f32 %v177, %v185
    %v188 = vmul.f32 %v186, 0.7978846
    %v189 = vmul.f32 %v187, 0.7978846
    %v190 = vtanh.pop %v188
    %v191 = vtanh.pop %v189
    %v192 = vadd.f32 %v190, 1.0
    %v193 = vadd.f32 %v191, 1.0
    %v194 = vmul.f32 %v192, 0.5
    %v195 = vmul.f32 %v193, 0.5
    %v196 = vmul.f32 %v174, %v194
    %v197 = vmul.f32 %v177, %v195
    %v198 = vld [vmem:[#allocation7] sm:$0xff]
    %v199 = vld [vmem:[#allocation7 + $0x8] sm:$0xff]
    %v200 = vadd.f32 %v196, %v198
    %v201 = vadd.f32 %v197, %v199
    %202 = vst [vmem:[#allocation8] sm:$0xff] %v200
    %203 = vst [vmem:[#allocation8 + $0x8] sm:$0xff] %v201
    // Predicated region
    $region30: #{tpu_custom_call.1} parent=1 // pred_check
      _
    $region31: #{tpu_custom_call.1} parent=1 // pred_check_branch
      %205 = sbr.rel (0) target = $region33
    $region32: #{tpu_custom_call.1} parent=1 // pred_region
      %s207 = ssub.s32 256, 256
      %208 = vsyncadd [#allocation4], %s207
      %s209 = sshll.u32 [#allocation8], 4
      %s210 = int_to_ptr.vmem [resolvable:$true] %s209
      %215 = dma.vmem_to_hbm [thread:$0]  %s210, 256, %s4, [#allocation4], 128, 128, 8
    $region33: #{tpu_custom_call.1} parent=1 // pred_fallthru
      _
    // Predicated region
    $region34: #{tpu_custom_call.1} parent=1 // pred_check
      _
    $region35: #{tpu_custom_call.1} parent=1 // pred_check_branch
      %217 = sbr.rel (0) target = $region37
    $region36: #{tpu_custom_call.1} parent=1 // pred_region
      %218 = dma.done [#allocation4], 256
    $region37: #{tpu_custom_call.1} parent=1 // pred_fallthru
      _
    %219 = vsyncpa [#allocation3], 1
    %220 = vsyncpa [#allocation6], 1
    %221 = vsyncpa [#allocation4], 1

</llo_original>
